<compile_context>
chip_gen: v6e
topology: v6e:2x2x1
jax: 0.10.0
libtpu: 0.0.40
codegen_flags: <defaults>
</compile_context>

<pallas_src>
import math
import functools

import jax
import jax.numpy as jnp
from jax import lax
from jax.experimental import pallas as pl
from jax.experimental.pallas import tpu as pltpu


def _round_up(x, m):
    return (x + m - 1) // m * m


def _fused_conv_kernel(x_ref, w_ref, b_ref, o_ref, slab_ref, *,
                       kh, kw, cin, w_pad, l_pad, scale):
    """One grid step == one image, transposed (Cout, L) formulation.

    x_ref:    (1, Cin, cols_pad)  bf16  padded NCHW image, (H,W) flattened on lanes
    w_ref:    (Cout, K)           bf16  K = KH*KW*Cin, unscaled weight matrix
    b_ref:    (Cout, 1)           f32   bias column
    o_ref:    (1, Cout, L_pad)    f32   outputs for every flat padded-grid position
    slab_ref: (K, L_pad)          bf16  VMEM im2col slab (scratch)
    """
    # In-VMEM im2col: each tap is a *static* lane shift of the same VMEM-resident
    # image block.  Every input element is DMA'd from HBM exactly once and was
    # cast to bf16 once in the wrapper.  Loop bounds are Python ints -> unrolled.
    for t in range(kh * kw):
        i, j = divmod(t, kw)
        off = i * w_pad + j                                   # static flat tap shift
        slab_ref[pl.ds(t * cin, cin), :] = x_ref[0, :, pl.ds(off, l_pad)]

    # Single fused-K matmul: (Cout, K) @ (K, L_pad) -> (Cout, L_pad), f32 acc.
    acc = jnp.dot(w_ref[...], slab_ref[...], preferred_element_type=jnp.float32)

    # ScaleWeights hook + bias fused once into the epilogue; lane-dense store.
    o_ref[0] = (acc * scale + b_ref[...]).astype(o_ref.dtype)


@functools.partial(jax.jit, static_argnames=("padding", "stride"))
def scaled_conv2d(x_nchw, weight, bias, *, padding=1, stride=1):
    """x_nchw: (N, C_in, H, W); weight: (C_out, C_in, KH, KW); bias: (C_out,)."""
    cout, cin, kh, kw = weight.shape
    n, _, h, w = x_nchw.shape

    fan_in = cin * kh * kw
    scale = math.sqrt(2.0 / fan_in)

    h_pad, w_pad = h + 2 * padding, w + 2 * padding
    ho = (h_pad - kh) // stride + 1
    wo = (w_pad - kw) // stride + 1
    h_valid = h_pad - kh + 1              # rows whose full window fits vertically

    l_compute = h_valid * w_pad           # flat window origins we compute
    l_pad = _round_up(l_compute, 128)     # lane-dense output minor dim
    cols_need = l_pad + (kh - 1) * w_pad + (kw - 1)   # furthest lane any tap reads
    cols_pad = _round_up(cols_need, 128)

    # Keep NCHW (no transpose): spatial zero pad, flatten (H,W) onto lanes,
    # pad lanes, cast to bf16 once.  XLA fuses these into one pass over x.
    x = jnp.pad(x_nchw, ((0, 0), (0, 0), (padding, padding), (padding, padding)))
    x = x.reshape(n, cin, h_pad * w_pad)
    x = jnp.pad(x, ((0, 0), (0, 0), (0, cols_pad - h_pad * w_pad)))
    x = x.astype(jnp.bfloat16)

    # Weight as a dense 2-D (Cout, K) matrix, K ordered (kh, kw, cin) to match
    # the slab row order; unscaled, bf16.  Bias as an f32 column.
    k_dim = cin * kh * kw
    w_mat = jnp.transpose(weight, (0, 2, 3, 1)).reshape(cout, k_dim)
    w_mat = w_mat.astype(jnp.bfloat16)
    b_col = bias.reshape(cout, 1).astype(jnp.float32)

    kernel = functools.partial(_fused_conv_kernel, kh=kh, kw=kw, cin=cin,
                               w_pad=w_pad, l_pad=l_pad, scale=scale)

    out = pl.pallas_call(
        kernel,
        out_shape=jax.ShapeDtypeStruct((n, cout, l_pad), jnp.float32),
        grid_spec=pltpu.PrefetchScalarGridSpec(
            num_scalar_prefetch=0,
            grid=(n,),
            in_specs=[
                pl.BlockSpec((1, cin, cols_pad), lambda b: (b, 0, 0)),
                pl.BlockSpec((cout, k_dim), lambda b: (0, 0)),
                pl.BlockSpec((cout, 1), lambda b: (0, 0)),
            ],
            out_specs=pl.BlockSpec((1, cout, l_pad), lambda b: (b, 0, 0)),
            scratch_shapes=[pltpu.VMEM((k_dim, l_pad), jnp.bfloat16)],
        ),
        compiler_params=pltpu.CompilerParams(
            dimension_semantics=("parallel",)),   # batch split across v7x's 2 TCs
    )(x, w_mat, b_col)

    # Output is already NCHW-ordered: drop padded flat positions / invalid
    # right-edge window origins and apply stride.  No transposes needed.
    out = out[:, :, :l_compute].reshape(n, cout, h_valid, w_pad)
    # TODO(synk): stride>1 positions are computed then discarded here; a
    # stride-aware index_map / in-kernel selection would avoid the extra work.
    out = out[:, :, 0:(ho - 1) * stride + 1:stride, 0:(wo - 1) * stride + 1:stride]
    return out.astype(x_nchw.dtype)


def _reference_conv(x_nchw, weight, bias, padding, stride):
    cout, cin, kh, kw = weight.shape
    scale = math.sqrt(2.0 / (cin * kh * kw))
    y = lax.conv_general_dilated(
        x_nchw.astype(jnp.float32), (weight * scale).astype(jnp.float32),
        window_strides=(stride, stride),
        padding=[(padding, padding), (padding, padding)],
        dimension_numbers=("NCHW", "OIHW", "NCHW"))
    return y + bias.reshape(1, cout, 1, 1)


if __name__ == "__main__":
    key = jax.random.PRNGKey(0)
    k_x, k_w = jax.random.split(key)

    # ScaledConv2d(4, 8, kernel_size=3, padding=1) on a (2, 4, 16, 16) input
    N, C_in, H, W = 2, 4, 16, 16
    C_out, KH, KW = 8, 3, 3

    x = jax.random.normal(k_x, (N, C_in, H, W), dtype=jnp.float32)
    weight = jax.random.normal(k_w, (C_out, C_in, KH, KW), dtype=jnp.float32)  # .normal_()
    bias = jnp.zeros((C_out,), dtype=jnp.float32)                              # .zero_()

    y = scaled_conv2d(x, weight, bias, padding=1, stride=1)
    y = jax.block_until_ready(y)

    y_ref = _reference_conv(x, weight, bias, padding=1, stride=1)
    assert y.shape == (N, C_out, H, W)
    # bf16 matmul operands with f32 accumulation -> compare with bf16-level tolerance.
    assert jnp.allclose(y, y_ref, atol=5e-2, rtol=5e-2), \
        float(jnp.max(jnp.abs(y - y_ref)))

    print("KERNEL_OK")
</pallas_src>

<mosaic_0001>
module attributes {stable_mosaic.version = 11 : i64} {
  func.func @_fused_conv_kernel(%arg0: i32, %arg1: memref<1x4x512xbf16, #tpu.memory_space<vmem>>, %arg2: memref<8x36xbf16, #tpu.memory_space<vmem>>, %arg3: memref<8x1xf32, #tpu.memory_space<vmem>>, %arg4: memref<1x8x384xf32, #tpu.memory_space<vmem>>, %arg5: memref<36x384xbf16, #tpu.memory_space<vmem>>) attributes {dimension_semantics = [#tpu.dimension_semantics<parallel>], iteration_bounds = array<i64: 2>, scalar_prefetch = 0 : i64, scratch_operands = 1 : i64, tpu.core_type = #tpu.core_type<tc>, window_params = [{transform_indices = @transform_0, window_bounds = array<i64: 1, 4, 512>}, {pipeline_mode = #tpu.pipeline_mode<synchronous>, transform_indices = @transform_1, window_bounds = array<i64: 8, 36>}, {pipeline_mode = #tpu.pipeline_mode<synchronous>, transform_indices = @transform_2, window_bounds = array<i64: 8, 1>}, {transform_indices = @transform_3, window_bounds = array<i64: 1, 8, 384>}]} {
    %c0 = arith.constant 0 : index
    %c0_0 = arith.constant 0 : index
    %c0_1 = arith.constant 0 : index
    %0 = vector.load %arg1[%c0, %c0_0, %c0_1] : memref<1x4x512xbf16, #tpu.memory_space<vmem>>, vector<1x4x384xbf16>
    %1 = vector.shape_cast %0 : vector<1x4x384xbf16> to vector<4x384xbf16>
    %c0_2 = arith.constant 0 : index
    %c0_3 = arith.constant 0 : index
    %2 = vector.load %arg5[%c0_2, %c0_3] : memref<36x384xbf16, #tpu.memory_space<vmem>>, vector<4x384xbf16>
    tpu.vector_store %arg5[%c0_2, %c0_3], %1 {strides = array<i32>} : memref<36x384xbf16, #tpu.memory_space<vmem>>, vector<4x384xbf16>,
    %c0_4 = arith.constant 0 : index
    %c0_5 = arith.constant 0 : index
    %c1 = arith.constant 1 : index
    %3 = vector.load %arg1[%c0_4, %c0_5, %c1] : memref<1x4x512xbf16, #tpu.memory_space<vmem>>, vector<1x4x384xbf16>
    %4 = vector.shape_cast %3 : vector<1x4x384xbf16> to vector<4x384xbf16>
    %c4 = arith.constant 4 : index
    %c0_6 = arith.constant 0 : index
    %5 = vector.load %arg5[%c4, %c0_6] : memref<36x384xbf16, #tpu.memory_space<vmem>>, vector<4x384xbf16>
    tpu.vector_store %arg5[%c4, %c0_6], %4 {strides = array<i32>} : memref<36x384xbf16, #tpu.memory_space<vmem>>, vector<4x384xbf16>,
    %c0_7 = arith.constant 0 : index
    %c0_8 = arith.constant 0 : index
    %c2 = arith.constant 2 : index
    %6 = vector.load %arg1[%c0_7, %c0_8, %c2] : memref<1x4x512xbf16, #tpu.memory_space<vmem>>, vector<1x4x384xbf16>
    %7 = vector.shape_cast %6 : vector<1x4x384xbf16> to vector<4x384xbf16>
    %c8 = arith.constant 8 : index
    %c0_9 = arith.constant 0 : index
    %8 = vector.load %arg5[%c8, %c0_9] : memref<36x384xbf16, #tpu.memory_space<vmem>>, vector<4x384xbf16>
    tpu.vector_store %arg5[%c8, %c0_9], %7 {strides = array<i32>} : memref<36x384xbf16, #tpu.memory_space<vmem>>, vector<4x384xbf16>,
    %c0_10 = arith.constant 0 : index
    %c0_11 = arith.constant 0 : index
    %c18 = arith.constant 18 : index
    %9 = vector.load %arg1[%c0_10, %c0_11, %c18] : memref<1x4x512xbf16, #tpu.memory_space<vmem>>, vector<1x4x384xbf16>
    %10 = vector.shape_cast %9 : vector<1x4x384xbf16> to vector<4x384xbf16>
    %c12 = arith.constant 12 : index
    %c0_12 = arith.constant 0 : index
    %11 = vector.load %arg5[%c12, %c0_12] : memref<36x384xbf16, #tpu.memory_space<vmem>>, vector<4x384xbf16>
    tpu.vector_store %arg5[%c12, %c0_12], %10 {strides = array<i32>} : memref<36x384xbf16, #tpu.memory_space<vmem>>, vector<4x384xbf16>,
    %c0_13 = arith.constant 0 : index
    %c0_14 = arith.constant 0 : index
    %c19 = arith.constant 19 : index
    %12 = vector.load %arg1[%c0_13, %c0_14, %c19] : memref<1x4x512xbf16, #tpu.memory_space<vmem>>, vector<1x4x384xbf16>
    %13 = vector.shape_cast %12 : vector<1x4x384xbf16> to vector<4x384xbf16>
    %c16 = arith.constant 16 : index
    %c0_15 = arith.constant 0 : index
    %14 = vector.load %arg5[%c16, %c0_15] : memref<36x384xbf16, #tpu.memory_space<vmem>>, vector<4x384xbf16>
    tpu.vector_store %arg5[%c16, %c0_15], %13 {strides = array<i32>} : memref<36x384xbf16, #tpu.memory_space<vmem>>, vector<4x384xbf16>,
    %c0_16 = arith.constant 0 : index
    %c0_17 = arith.constant 0 : index
    %c20 = arith.constant 20 : index
    %15 = vector.load %arg1[%c0_16, %c0_17, %c20] : memref<1x4x512xbf16, #tpu.memory_space<vmem>>, vector<1x4x384xbf16>
    %16 = vector.shape_cast %15 : vector<1x4x384xbf16> to vector<4x384xbf16>
    %c20_18 = arith.constant 20 : index
    %c0_19 = arith.constant 0 : index
    %17 = vector.load %arg5[%c20_18, %c0_19] : memref<36x384xbf16, #tpu.memory_space<vmem>>, vector<4x384xbf16>
    tpu.vector_store %arg5[%c20_18, %c0_19], %16 {strides = array<i32>} : memref<36x384xbf16, #tpu.memory_space<vmem>>, vector<4x384xbf16>,
    %c0_20 = arith.constant 0 : index
    %c0_21 = arith.constant 0 : index
    %c36 = arith.constant 36 : index
    %18 = vector.load %arg1[%c0_20, %c0_21, %c36] : memref<1x4x512xbf16, #tpu.memory_space<vmem>>, vector<1x4x384xbf16>
    %19 = vector.shape_cast %18 : vector<1x4x384xbf16> to vector<4x384xbf16>
    %c24 = arith.constant 24 : index
    %c0_22 = arith.constant 0 : index
    %20 = vector.load %arg5[%c24, %c0_22] : memref<36x384xbf16, #tpu.memory_space<vmem>>, vector<4x384xbf16>
    tpu.vector_store %arg5[%c24, %c0_22], %19 {strides = array<i32>} : memref<36x384xbf16, #tpu.memory_space<vmem>>, vector<4x384xbf16>,
    %c0_23 = arith.constant 0 : index
    %c0_24 = arith.constant 0 : index
    %c37 = arith.constant 37 : index
    %21 = vector.load %arg1[%c0_23, %c0_24, %c37] : memref<1x4x512xbf16, #tpu.memory_space<vmem>>, vector<1x4x384xbf16>
    %22 = vector.shape_cast %21 : vector<1x4x384xbf16> to vector<4x384xbf16>
    %c28 = arith.constant 28 : index
    %c0_25 = arith.constant 0 : index
    %23 = vector.load %arg5[%c28, %c0_25] : memref<36x384xbf16, #tpu.memory_space<vmem>>, vector<4x384xbf16>
    tpu.vector_store %arg5[%c28, %c0_25], %22 {strides = array<i32>} : memref<36x384xbf16, #tpu.memory_space<vmem>>, vector<4x384xbf16>,
    %c0_26 = arith.constant 0 : index
    %c0_27 = arith.constant 0 : index
    %c38 = arith.constant 38 : index
    %24 = vector.load %arg1[%c0_26, %c0_27, %c38] : memref<1x4x512xbf16, #tpu.memory_space<vmem>>, vector<1x4x384xbf16>
    %25 = vector.shape_cast %24 : vector<1x4x384xbf16> to vector<4x384xbf16>
    %c32 = arith.constant 32 : index
    %c0_28 = arith.constant 0 : index
    %26 = vector.load %arg5[%c32, %c0_28] : memref<36x384xbf16, #tpu.memory_space<vmem>>, vector<4x384xbf16>
    tpu.vector_store %arg5[%c32, %c0_28], %25 {strides = array<i32>} : memref<36x384xbf16, #tpu.memory_space<vmem>>, vector<4x384xbf16>,
    %c0_29 = arith.constant 0 : index
    %c0_30 = arith.constant 0 : index
    %27 = vector.load %arg2[%c0_29, %c0_30] : memref<8x36xbf16, #tpu.memory_space<vmem>>, vector<8x36xbf16>
    %c0_31 = arith.constant 0 : index
    %c0_32 = arith.constant 0 : index
    %28 = vector.load %arg5[%c0_31, %c0_32] : memref<36x384xbf16, #tpu.memory_space<vmem>>, vector<36x384xbf16>
    %cst = arith.constant dense<0.000000e+00> : vector<8x384xf32>
    %29 = tpu.matmul %27, %28, %cst {dimension_numbers = #tpu.dot_dimension_numbers<[1], [0], [0], [1], [0, 0, 1, 1], [], []>} : vector<8x36xbf16>, vector<36x384xbf16>, vector<8x384xf32> -> vector<8x384xf32>
    %cst_33 = arith.constant 0.235702261 : f32
    %30 = vector.broadcast %cst_33 : f32 to vector<8x384xf32>
    %31 = arith.mulf %29, %30 : vector<8x384xf32>
    %c0_34 = arith.constant 0 : index
    %c0_35 = arith.constant 0 : index
    %32 = vector.load %arg3[%c0_34, %c0_35] : memref<8x1xf32, #tpu.memory_space<vmem>>, vector<8x1xf32>
    %33 = vector.broadcast %32 : vector<8x1xf32> to vector<8x384xf32>
    %34 = arith.addf %31, %33 : vector<8x384xf32>
    %c0_36 = arith.constant 0 : index
    %c0_37 = arith.constant 0 : index
    %c0_38 = arith.constant 0 : index
    %35 = vector.load %arg4[%c0_36, %c0_37, %c0_38] : memref<1x8x384xf32, #tpu.memory_space<vmem>>, vector<1x8x384xf32>
    %36 = vector.shape_cast %35 : vector<1x8x384xf32> to vector<8x384xf32>
    %37 = vector.shape_cast %34 : vector<8x384xf32> to vector<1x8x384xf32>
    tpu.vector_store %arg4[%c0_36, %c0_37, %c0_38], %37 {strides = array<i32>} : memref<1x8x384xf32, #tpu.memory_space<vmem>>, vector<1x8x384xf32>,
    return
  }
  func.func @transform_0(%arg0: i32) -> (i32, i32, i32) {
    %c0_i32 = arith.constant 0 : i32
    %c0_i32_0 = arith.constant 0 : i32
    %c0_i32_1 = arith.constant 0 : i32
    return %arg0, %c0_i32, %c0_i32_0 : i32, i32, i32
  }
  func.func @transform_1(%arg0: i32) -> (i32, i32) {
    %c0_i32 = arith.constant 0 : i32
    %c0_i32_0 = arith.constant 0 : i32
    %c0_i32_1 = arith.constant 0 : i32
    return %c0_i32, %c0_i32_0 : i32, i32
  }
  func.func @transform_2(%arg0: i32) -> (i32, i32) {
    %c0_i32 = arith.constant 0 : i32
    %c0_i32_0 = arith.constant 0 : i32
    %c0_i32_1 = arith.constant 0 : i32
    return %c0_i32, %c0_i32_0 : i32, i32
  }
  func.func @transform_3(%arg0: i32) -> (i32, i32, i32) {
    %c0_i32 = arith.constant 0 : i32
    %c0_i32_0 = arith.constant 0 : i32
    %c0_i32_1 = arith.constant 0 : i32
    return %arg0, %c0_i32, %c0_i32_0 : i32, i32, i32
  }
}

</mosaic_0001>

<llo_original>
// kernel: scaled_conv2d.1
$region0: #{scaled_conv2d.1}
  #allocation0 [shape = 'u32[]', space=smem, size = 0x4, offset = 0x4, fixed_abs, tag = 'smem constant byte address 0x4 - core index']
  #allocation1 [shape = 'u32[144,128]{1,0:T(1,128)}', space=vmem, size = 0x12000, scoped, tag = 'internal scratch']
  #allocation2 [shape = 'bf16[36,384]{1,0:T(8,128)(2,1)}', space=vmem, size = 0x7800, scoped, tag = 'scratch operand']
  %s0 = inlined_call_operand.vmem [shape: bf16[2,4,512], index: 0, kind: input, shape index: {}]
  %s1 = inlined_call_operand.vmem [shape: bf16[8,36], index: 1, kind: input, shape index: {}]
  %s2 = inlined_call_operand.vmem [shape: f32[8,1], index: 2, kind: input, shape index: {}]
  %s3 = inlined_call_operand.vmem [shape: f32[2,8,384], index: 3, kind: output, shape index: {}]
  %s4 = sld [smem:[#allocation0]]
  $region45: #{scaled_conv2d.1} parent=0
    _
  %s6 = ssub.s32 1, %s4
  %s7 = scalar_select 0, %s6, %s4
  loop: start=0, step=1, limit=4
  $region2: #{scaled_conv2d.1} parent=0 // loop_pre_header
    _
  $region3: #{scaled_conv2d.1} parent=0 // loop_header
    %s9 = sphi 0, %s13
    %p10 = scmp.ge.s32.totalorder %s9, 4
    %s19 = sphi 0, %s21
    %s22 = sphi 0, %s19
    %s23 = sphi 0, %s22
    %s39 = sphi 0, %s23
    %s43 = sphi 0, %s43
    %s45 = sphi 0, %s43
    %s46 = sphi 0, %s45
    %s60 = sphi 0, %s46
    %s64 = sphi 0, %s64
    %s66 = sphi 0, %s64
    %s67 = sphi 0, %s66
    %s81 = sphi 0, %s67
    %s87 = sphi 0, %s89
    %s90 = sphi 0, %s87
    %s91 = sphi 0, %s90
    %s107 = sphi 0, %s91
  $region4: #{scaled_conv2d.1} parent=0 // loop_header_branch
    %12 = sbr.rel (%p10) target = $region8
  $region5: #{scaled_conv2d.1} parent=0 // loop_body
    %s14 = ssub.s32 %s9, 1
    %s15 = ssub.s32 %s9, 2
    %s16 = sadd.s32 %s9, 1
    %s17 = ssub.s32 %s9, %s16
    %p18 = scmp.eq.s32.totalorder %s17, 0
    %s20 = sadd.s32 %s19, 1
    %s21 = scalar_select %p18, %s19, %s20
    %p24 = pneg %p18
    %p25 = scmp.eq.s32.totalorder %s9, 1
    %p26 = por %p24, %p25
    %p27 = scmp.ne.s32.totalorder %s19, %s22
    %p28 = scmp.eq.s32.totalorder %s9, 0
    %p29 = por %p27, %p28
    %p30 = scmp.ne.s32.totalorder %s19, %s22
    %p31 = scmp.eq.s32.totalorder %s14, 1
    %p32 = por %p30, %p31
    %p33 = scmp.ne.s32.totalorder %s22, %s23
    %p34 = scmp.eq.s32.totalorder %s14, 0
    %p35 = por %p33, %p34
    %p36 = scmp.ne.s32.totalorder %s22, %s23
    %p37 = scmp.eq.s32.totalorder %s15, 1
    %p38 = por %p36, %p37
    %p40 = scmp.ne.s32.totalorder %s23, %s39
    %p41 = scmp.eq.s32.totalorder %s15, 0
    %p42 = por %p40, %p41
    %s44 = sadd.s32 %s43, 1
    %p47 = scmp.eq.s32.totalorder %s9, 1
    %p48 = scmp.ne.s32.totalorder %s43, %s45
    %p49 = scmp.eq.s32.totalorder %s9, 0
    %p50 = por %p48, %p49
    %p51 = scmp.ne.s32.totalorder %s43, %s45
    %p52 = scmp.eq.s32.totalorder %s14, 1
    %p53 = por %p51, %p52
    %p54 = scmp.ne.s32.totalorder %s45, %s46
    %p55 = scmp.eq.s32.totalorder %s14, 0
    %p56 = por %p54, %p55
    %p57 = scmp.ne.s32.totalorder %s45, %s46
    %p58 = scmp.eq.s32.totalorder %s15, 1
    %p59 = por %p57, %p58
    %p61 = scmp.ne.s32.totalorder %s46, %s60
    %p62 = scmp.eq.s32.totalorder %s15, 0
    %p63 = por %p61, %p62
    %s65 = sadd.s32 %s64, 1
    %p68 = scmp.eq.s32.totalorder %s9, 1
    %p69 = scmp.ne.s32.totalorder %s64, %s66
    %p70 = scmp.eq.s32.totalorder %s9, 0
    %p71 = por %p69, %p70
    %p72 = scmp.ne.s32.totalorder %s64, %s66
    %p73 = scmp.eq.s32.totalorder %s14, 1
    %p74 = por %p72, %p73
    %p75 = scmp.ne.s32.totalorder %s66, %s67
    %p76 = scmp.eq.s32.totalorder %s14, 0
    %p77 = por %p75, %p76
    %p78 = scmp.ne.s32.totalorder %s66, %s67
    %p79 = scmp.eq.s32.totalorder %s15, 1
    %p80 = por %p78, %p79
    %p82 = scmp.ne.s32.totalorder %s67, %s81
    %p83 = scmp.eq.s32.totalorder %s15, 0
    %p84 = por %p82, %p83
    %s85 = ssub.s32 %s9, %s16
    %p86 = scmp.eq.s32.totalorder %s85, 0
    %s88 = sadd.s32 %s87, 1
    %s89 = scalar_select %p86, %s87, %s88
    %p92 = pneg %p86
    %p93 = scmp.eq.s32.totalorder %s9, 1
    %p94 = por %p92, %p93
    %p95 = scmp.ne.s32.totalorder %s87, %s90
    %p96 = scmp.eq.s32.totalorder %s9, 0
    %p97 = por %p95, %p96
    %p98 = scmp.ne.s32.totalorder %s87, %s90
    %p99 = scmp.eq.s32.totalorder %s14, 1
    %p100 = por %p98, %p99
    %p101 = scmp.ne.s32.totalorder %s90, %s91
    %p102 = scmp.eq.s32.totalorder %s14, 0
    %p103 = por %p101, %p102
    %p104 = scmp.ne.s32.totalorder %s90, %s91
    %p105 = scmp.eq.s32.totalorder %s15, 1
    %p106 = por %p104, %p105
    %p108 = scmp.ne.s32.totalorder %s91, %s107
    %p109 = scmp.eq.s32.totalorder %s15, 0
    %p110 = por %p108, %p109
    %p111 = scmp.le.s32.totalorder 1, %s9
    %p112 = scmp.lt.s32.totalorder %s9, 3
    %p113 = pnand %p111, %p112
    %p114 = pneg %p113
    // Predicated region
    $region9: #{scaled_conv2d.1} parent=5 // pred_check
      _
    $region10: #{scaled_conv2d.1} parent=5 // pred_check_branch
      %116 = sbr.rel (%p113) target = $region12
    $region11: #{scaled_conv2d.1} parent=5 // pred_region
      %s117 = ssub.s32 %s9, 1
      // Predicated region
      $region13: #{scaled_conv2d.1} parent=11 // pred_check
        %p118 = pneg %p56
      $region14: #{scaled_conv2d.1} parent=11 // pred_check_branch
        %120 = sbr.rel (%p118) target = $region16
      $region15: #{scaled_conv2d.1} parent=11 // pred_region
        _
      $region16: #{scaled_conv2d.1} parent=11 // pred_fallthru
        _
      // Predicated region
      $region17: #{scaled_conv2d.1} parent=11 // pred_check
        %p121 = pneg %p77
      $region18: #{scaled_conv2d.1} parent=11 // pred_check_branch
        %123 = sbr.rel (%p121) target = $region20
      $region19: #{scaled_conv2d.1} parent=11 // pred_region
        _
      $region20: #{scaled_conv2d.1} parent=11 // pred_fallthru
        _
    $region12: #{scaled_conv2d.1} parent=5 // pred_fallthru
      _
    %p124 = scmp.lt.s32.totalorder %s9, 2
    // Predicated region
    $region21: #{scaled_conv2d.1} parent=5 // pred_check
      %p125 = pneg %p124
    $region22: #{scaled_conv2d.1} parent=5 // pred_check_branch
      %127 = sbr.rel (%p125) target = $region24
    $region23: #{scaled_conv2d.1} parent=5 // pred_region
      // Predicated region
      $region25: #{scaled_conv2d.1} parent=23 // pred_check
        %p128 = pneg %p29
      $region26: #{scaled_conv2d.1} parent=23 // pred_check_branch
        %130 = sbr.rel (%p128) target = $region28
      $region27: #{scaled_conv2d.1} parent=23 // pred_region
        %p131 = scmp.lt.s32.totalorder %s9, 1
        %s132 = scalar_select %p131, %s9, 1
        %s133 = smul.addr %s132, 4
        %s134 = smul.addr %s133, 2
        %s135 = scalar_lea.vmem %s0, %s134
      $region28: #{scaled_conv2d.1} parent=23 // pred_fallthru
        _
    $region24: #{scaled_conv2d.1} parent=5 // pred_fallthru
      _
    %p136 = scmp.le.s32.totalorder 1, %s9
    %p137 = scmp.lt.s32.totalorder %s9, 3
    %p138 = pnand %p136, %p137
    %p139 = pneg %p138
    // Predicated region
    $region29: #{scaled_conv2d.1} parent=5 // pred_check
      _
    $region30: #{scaled_conv2d.1} parent=5 // pred_check_branch
      %141 = sbr.rel (%p138) target = $region32
    $region31: #{scaled_conv2d.1} parent=5 // pred_region
      %s142 = ssub.s32 %s9, 1
      %p143 = scmp.lt.s32.totalorder %s14, 1
      %s144 = scalar_select %p143, %s14, 1
      %s145 = smul.addr %s144, 4
      %s146 = smul.addr %s145, 2
      %s147 = scalar_lea.vmem %s0, %s146
      %p148 = pneg %p35
      %p149 = pneg %p32
      %p150 = pneg %p56
      %p151 = pneg %p53
      %p152 = pneg %p77
      %p153 = pneg %p74
      %p154 = pneg %p103
      %p155 = pneg %p100
      %p156 = scmp.lt.s32.totalorder %s14, 1
      %s157 = scalar_select %p156, %s14, 1
      %s158 = smul.addr %s157, 3
      %s159 = smul.addr %s158, 8
      %s160 = scalar_lea.vmem %s3, %s159
      %p161 = scmp.lt.s32.totalorder %s14, 1
      %s162 = scalar_select %p161, %s14, 1
      %s163 = smul.addr %s162, 4
      %s164 = smul.addr %s163, 2
      %s165 = scalar_lea.vmem %s0, %s164
      %p166 = scmp.lt.s32.totalorder %s14, 1
      %s167 = scalar_select %p166, %s14, 1
      %s168 = smul.addr %s167, 3
      %s169 = smul.addr %s168, 8
      %s170 = scalar_lea.vmem %s3, %s169
      %v172 = vld [vmem:[%s165] sm:$0x3f]
      %v174 = vcombine.high %v172, %v172
      %v176 = vunpack.c.l.s4 1983009808
      %v177 = vunpack.c.0.s8 %v176
      %v178 = vlaneseq
      %v179 = vshrl.u32 %v178, 7
      %v180 = vsub.s32 %v177, %v179
      %v181 = vrot.slane %v172, %v180
      %v183 = vunpack.c.l.s4 1983009808
      %v184 = vunpack.c.0.s8 %v183
      %v185 = vlaneseq
      %v186 = vshrl.u32 %v185, 7
      %v187 = vsub.s32 %v184, %v186
      %v188 = vrot.slane %v174, %v187
      %191 = vst [vmem:[#allocation2] sm:$0x33] %v181
      %192 = vst [vmem:[#allocation2 + $0x8] sm:$0x3] %v188
      %v193 = vld [vmem:[%s165] sm:$0xff]
      %v195 = vcombine.low %v193, %v193
      %v197 = vunpack.c.l.s4 1983009808
      %v198 = vunpack.c.0.s8 %v197
      %v199 = vlaneseq
      %v200 = vshrl.u32 %v199, 7
      %v201 = vsub.s32 %v198, %v200
      %v202 = vrot.slane %v195, %v201
      %v204 = vunpack.c.l.s4 1983009808
      %v205 = vunpack.c.0.s8 %v204
      %v206 = vlaneseq
      %v207 = vshrl.u32 %v206, 7
      %v208 = vsub.s32 %v205, %v207
      %v209 = vrot.slane %v193, %v208
      %210 = vrot.lane.b32.xlu0 %v202, 127
      %v211 = vpop.permute.xlu0 %210
      %212 = vrot.lane.b32.xlu0 %v209, 127
      %v213 = vpop.permute.xlu0 %212
      %v214 = vrot.slane %v211, 4
      %v215 = vrot.slane %v213, 4
      %vm216 = vcmask 1043456
      %v217 = vsel %vm216, %v214, %v215
      %vm218 = vcmask 1039360
      %v219 = vsel %vm218, %v211, %v217
      %v220 = vsel %vm218, %v213, %v215
      %223 = vst [vmem:[#allocation2] sm:$0xcc] %v219
      %224 = vst [vmem:[#allocation2 + $0x8] sm:$0xc] %v220
      %v225 = vld [vmem:[%s165] sm:$0xff]
      %v227 = vcombine.high %v225, %v225
      %v229 = vunpack.c.l.s4 1983009808
      %v230 = vunpack.c.0.s8 %v229
      %v231 = vlaneseq
      %v232 = vshrl.u32 %v231, 7
      %v233 = vsub.s32 %v230, %v232
      %v234 = vrot.slane %v225, %v233
      %v236 = vunpack.c.l.s4 1983009808
      %v237 = vunpack.c.0.s8 %v236
      %v238 = vlaneseq
      %v239 = vshrl.u32 %v238, 7
      %v240 = vsub.s32 %v237, %v239
      %v241 = vrot.slane %v227, %v240
      %242 = vrot.lane.b32.xlu0 %v234, 126
      %v243 = vpop.permute.xlu0 %242
      %244 = vrot.lane.b32.xlu0 %v241, 126
      %v245 = vpop.permute.xlu0 %244
      %v246 = vrot.slane %v243, 4
      %v247 = vrot.slane %v245, 4
      %v248 = vsel %vm216, %v246, %v247
      %vm249 = vcmask 1031168
      %v250 = vsel %vm249, %v243, %v248
      %v251 = vsel %vm249, %v245, %v247
      %254 = vst [vmem:[#allocation2 + $0xc] sm:$0x33] %v250
      %255 = vst [vmem:[#allocation2 + $0x14] sm:$0x3] %v251
      %v256 = vld [vmem:[%s165] sm:$0xff]
      %v258 = vcombine.low %v256, %v256
      %v260 = vunpack.c.l.s4 1983009808
      %v261 = vunpack.c.0.s8 %v260
      %v262 = vlaneseq
      %v263 = vshrl.u32 %v262, 7
      %v264 = vsub.s32 %v261, %v263
      %v265 = vrot.slane %v258, %v264
      %v267 = vunpack.c.l.s4 1983009808
      %v268 = vunpack.c.0.s8 %v267
      %v269 = vlaneseq
      %v270 = vshrl.u32 %v269, 7
      %v271 = vsub.s32 %v268, %v270
      %v272 = vrot.slane %v256, %v271
      %273 = vrot.lane.b32.xlu0 %v265, 110
      %v274 = vpop.permute.xlu0 %273
      %275 = vrot.lane.b32.xlu0 %v272, 110
      %v276 = vpop.permute.xlu0 %275
      %v277 = vrot.slane %v274, 4
      %v278 = vrot.slane %v276, 4
      %v279 = vsel %vm216, %v277, %v278
      %vm280 = vcmask 900096
      %v281 = vsel %vm280, %v274, %v279
      %v282 = vsel %vm280, %v276, %v278
      %285 = vst [vmem:[#allocation2 + $0xc] sm:$0xcc] %v281
      %286 = vst [vmem:[#allocation2 + $0x14] sm:$0xc] %v282
      %v287 = vld [vmem:[%s165] sm:$0xff]
      %v289 = vcombine.high %v287, %v287
      %v291 = vunpack.c.l.s4 1983009808
      %v292 = vunpack.c.0.s8 %v291
      %v293 = vlaneseq
      %v294 = vshrl.u32 %v293, 7
      %v295 = vsub.s32 %v292, %v294
      %v296 = vrot.slane %v287, %v295
      %v298 = vunpack.c.l.s4 1983009808
      %v299 = vunpack.c.0.s8 %v298
      %v300 = vlaneseq
      %v301 = vshrl.u32 %v300, 7
      %v302 = vsub.s32 %v299, %v301
      %v303 = vrot.slane %v289, %v302
      %304 = vrot.lane.b32.xlu0 %v296, 109
      %v305 = vpop.permute.xlu0 %304
      %306 = vrot.lane.b32.xlu0 %v303, 109
      %v307 = vpop.permute.xlu0 %306
      %v308 = vrot.slane %v305, 4
      %v309 = vrot.slane %v307, 4
      %v310 = vsel %vm216, %v308, %v309
      %vm311 = vcmask 891904
      %v312 = vsel %vm311, %v305, %v310
      %v313 = vsel %vm311, %v307, %v309
      %316 = vst [vmem:[#allocation2 + $0x18] sm:$0x33] %v312
      %317 = vst [vmem:[#allocation2 + $0x20] sm:$0x3] %v313
      %v318 = vld [vmem:[%s165] sm:$0xff]
      %v320 = vcombine.low %v318, %v318
      %v322 = vunpack.c.l.s4 1983009808
      %v323 = vunpack.c.0.s8 %v322
      %v324 = vlaneseq
      %v325 = vshrl.u32 %v324, 7
      %v326 = vsub.s32 %v323, %v325
      %v327 = vrot.slane %v320, %v326
      %v329 = vunpack.c.l.s4 1983009808
      %v330 = vunpack.c.0.s8 %v329
      %v331 = vlaneseq
      %v332 = vshrl.u32 %v331, 7
      %v333 = vsub.s32 %v330, %v332
      %v334 = vrot.slane %v318, %v333
      %335 = vrot.lane.b32.xlu0 %v327, 108
      %v336 = vpop.permute.xlu0 %335
      %337 = vrot.lane.b32.xlu0 %v334, 108
      %v338 = vpop.permute.xlu0 %337
      %v339 = vrot.slane %v336, 4
      %v340 = vrot.slane %v338, 4
      %v341 = vsel %vm216, %v339, %v340
      %vm342 = vcmask 883712
      %v343 = vsel %vm342, %v336, %v341
      %v344 = vsel %vm342, %v338, %v340
      %347 = vst [vmem:[#allocation2 + $0x18] sm:$0xcc] %v343
      %348 = vst [vmem:[#allocation2 + $0x20] sm:$0xc] %v344
      %v349 = vld [vmem:[%s165] sm:$0xff]
      %v351 = vcombine.high %v349, %v349
      %v353 = vunpack.c.l.s4 1983009808
      %v354 = vunpack.c.0.s8 %v353
      %v355 = vlaneseq
      %v356 = vshrl.u32 %v355, 7
      %v357 = vsub.s32 %v354, %v356
      %v358 = vrot.slane %v349, %v357
      %v360 = vunpack.c.l.s4 1983009808
      %v361 = vunpack.c.0.s8 %v360
      %v362 = vlaneseq
      %v363 = vshrl.u32 %v362, 7
      %v364 = vsub.s32 %v361, %v363
      %v365 = vrot.slane %v351, %v364
      %366 = vrot.lane.b32.xlu0 %v358, 92
      %v367 = vpop.permute.xlu0 %366
      %368 = vrot.lane.b32.xlu0 %v365, 92
      %v369 = vpop.permute.xlu0 %368
      %v370 = vrot.slane %v367, 4
      %v371 = vrot.slane %v369, 4
      %v372 = vsel %vm216, %v370, %v371
      %vm373 = vcmask 752640
      %v374 = vsel %vm373, %v367, %v372
      %v375 = vsel %vm373, %v369, %v371
      %378 = vst [vmem:[#allocation2 + $0x24] sm:$0x33] %v374
      %379 = vst [vmem:[#allocation2 + $0x2c] sm:$0x3] %v375
      %v380 = vld [vmem:[%s165] sm:$0xff]
      %v382 = vcombine.low %v380, %v380
      %v384 = vunpack.c.l.s4 1983009808
      %v385 = vunpack.c.0.s8 %v384
      %v386 = vlaneseq
      %v387 = vshrl.u32 %v386, 7
      %v388 = vsub.s32 %v385, %v387
      %v389 = vrot.slane %v382, %v388
      %v391 = vunpack.c.l.s4 1983009808
      %v392 = vunpack.c.0.s8 %v391
      %v393 = vlaneseq
      %v394 = vshrl.u32 %v393, 7
      %v395 = vsub.s32 %v392, %v394
      %v396 = vrot.slane %v380, %v395
      %397 = vrot.lane.b32.xlu0 %v389, 91
      %v398 = vpop.permute.xlu0 %397
      %399 = vrot.lane.b32.xlu0 %v396, 91
      %v400 = vpop.permute.xlu0 %399
      %v401 = vrot.slane %v398, 4
      %v402 = vrot.slane %v400, 4
      %v403 = vsel %vm216, %v401, %v402
      %vm404 = vcmask 744448
      %v405 = vsel %vm404, %v398, %v403
      %v406 = vsel %vm404, %v400, %v402
      %409 = vst [vmem:[#allocation2 + $0x24] sm:$0xcc] %v405
      %410 = vst [vmem:[#allocation2 + $0x2c] sm:$0xc] %v406
      %v411 = vld [vmem:[%s165] sm:$0xff]
      %v413 = vcombine.high %v411, %v411
      %v415 = vunpack.c.l.s4 1983009808
      %v416 = vunpack.c.0.s8 %v415
      %v417 = vlaneseq
      %v418 = vshrl.u32 %v417, 7
      %v419 = vsub.s32 %v416, %v418
      %v420 = vrot.slane %v411, %v419
      %v422 = vunpack.c.l.s4 1983009808
      %v423 = vunpack.c.0.s8 %v422
      %v424 = vlaneseq
      %v425 = vshrl.u32 %v424, 7
      %v426 = vsub.s32 %v423, %v425
      %v427 = vrot.slane %v413, %v426
      %428 = vrot.lane.b32.xlu0 %v420, 90
      %v429 = vpop.permute.xlu0 %428
      %430 = vrot.lane.b32.xlu0 %v427, 90
      %v431 = vpop.permute.xlu0 %430
      %v432 = vrot.slane %v429, 4
      %v433 = vrot.slane %v431, 4
      %v434 = vsel %vm216, %v432, %v433
      %vm435 = vcmask 736256
      %v436 = vsel %vm435, %v429, %v434
      %v437 = vsel %vm435, %v431, %v433
      %440 = vst [vmem:[#allocation2 + $0x30] sm:$0x33] %v436
      %441 = vst [vmem:[#allocation2 + $0x38] sm:$0x3] %v437
      %v442 = vld [vmem:[%s1] sm:$0xf]
      %v443 = vld [vmem:[#allocation2] sm:$0xff]
      %v444 = vld [vmem:[#allocation2 + $0x8] sm:$0xf]
      %v445 = vld [vmem:[#allocation2 + $0xc] sm:$0xff]
      %v446 = vld [vmem:[#allocation2 + $0x14] sm:$0xf]
      %v447 = vld [vmem:[#allocation2 + $0x18] sm:$0xff]
      %v448 = vld [vmem:[#allocation2 + $0x20] sm:$0xf]
      %v449 = vld [vmem:[#allocation2 + $0x24] sm:$0xff]
      %v450 = vld [vmem:[#allocation2 + $0x2c] sm:$0xf]
      %v451 = vld [vmem:[#allocation2 + $0x30] sm:$0x33]
      %v452 = vld [vmem:[#allocation2 + $0x38] sm:$0x3]
      %v463 = vunpack.c.l.b16 %v443
      %v464 = vunpack.c.h.b16 %v443
      %v465 = vunpack.c.l.b16 %v444
      %v466 = vunpack.c.l.b16 %v445
      %v467 = vunpack.c.h.b16 %v445
      %v468 = vunpack.c.l.b16 %v446
      %v469 = vunpack.c.l.b16 %v447
      %v470 = vunpack.c.h.b16 %v447
      %v471 = vunpack.c.l.b16 %v448
      %v472 = vunpack.c.l.b16 %v449
      %v473 = vunpack.c.h.b16 %v449
      %v474 = vunpack.c.l.b16 %v450
      %v475 = vunpack.c.l.b16 %v451
      %v476 = vunpack.c.h.b16 %v451
      %v477 = vunpack.c.l.b16 %v452
      %v478 = vpack.c.b16 %v466, %v463
      %v479 = vpack.c.b16 %v467, %v464
      %v480 = vpack.c.b16 %v468, %v465
      %v481 = vpack.c.b16 %v472, %v469
      %v482 = vpack.c.b16 %v473, %v470
      %v483 = vpack.c.b16 %v474, %v471
      %v484 = vpack.c.b16 %v475, %v475
      %v485 = vpack.c.b16 %v476, %v476
      %v486 = vpack.c.b16 %v477, %v477
      %vm493 = vcmask 293888
      %v495 = vsel %vm493, %v442, 0
      %vm497 = vcmask 1041408
      %v499 = vsel %vm497, %v484, 0
      %v502 = vsel %vm497, %v485, 0
      %v505 = vsel %vm497, %v486, 0
      %507 = vmatprep.subr.bf16.mxu0 0
      %508 = vmatpush1.bf16.msra.mxu0 0
      %509 = vmatprep.subr.bf16.mxu0 0
      %510 = vmatpush1.bf16.msra.mxu0 0
      %511 = vmatprep.subr.bf16.mxu0 0
      %512 = vmatpush1.bf16.msra.mxu0 0
      %513 = vmatprep.subr.bf16.mxu0 0
      %514 = vmatpush1.bf16.msra.mxu0 0
      %515 = vmatprep.subr.bf16.mxu0 0
      %516 = vmatpush1.bf16.msra.mxu0 0
      %517 = vmatprep.subr.bf16.mxu0 %v502
      %518 = vmatpush1.bf16.msra.mxu0 %v499
      %519 = vmatprep.subr.bf16.mxu0 %v482
      %520 = vmatpush1.bf16.msra.mxu0 %v481
      %521 = vmatprep.subr.bf16.mxu0 %v479
      %522 = vmatpush1.bf16.msra.mxu0 %v478
      %523 = vmatprep.subr.bf16.mxu0 0
      %524 = vmatpush2.bf16.msra.mxu0 0
      %525 = vmatprep.subr.bf16.mxu0 0
      %526 = vmatpush2.bf16.msra.mxu0 0
      %527 = vmatprep.subr.bf16.mxu0 0
      %528 = vmatpush2.bf16.msra.mxu0 0
      %529 = vmatprep.subr.bf16.mxu0 0
      %530 = vmatpush2.bf16.msra.mxu0 0
      %531 = vmatprep.subr.bf16.mxu0 0
      %532 = vmatpush2.bf16.msra.mxu0 0
      %533 = vmatprep.subr.bf16.mxu0 0
      %534 = vmatpush2.bf16.msra.mxu0 0
      %535 = vmatprep.subr.bf16.mxu0 0
      %536 = vmatpush2.bf16.msra.mxu0 0
      %537 = vmatprep.subr.bf16.mxu0 0
      %538 = vmatpush2.bf16.msra.mxu0 0
      %539 = vmatprep.mubr.bf16.mxu0 0
      %540 = vmatmul.mubr.bf16.gmra.mxu0 %v495
      %v541 = vpop.f32.mrf.mxu0
      %v542 = vadd.f32 0.0, %v541
      %v543 = vpop.f32.mrf.mxu0
      %v544 = vadd.f32 0.0, %v543
      %v545 = vpop.f32.mrf.mxu0
      %v546 = vpop.f32.mrf.mxu0
      %547 = vdwg.mxu0
      %548 = vmatprep.subr.bf16.mxu0 0
      %549 = vmatpush1.bf16.msra.mxu0 0
      %550 = vmatprep.subr.bf16.mxu0 0
      %551 = vmatpush1.bf16.msra.mxu0 0
      %552 = vmatprep.subr.bf16.mxu0 0
      %553 = vmatpush1.bf16.msra.mxu0 0
      %554 = vmatprep.subr.bf16.mxu0 0
      %555 = vmatpush1.bf16.msra.mxu0 0
      %556 = vmatprep.subr.bf16.mxu0 0
      %557 = vmatpush1.bf16.msra.mxu0 0
      %558 = vmatprep.subr.bf16.mxu0 0
      %559 = vmatpush1.bf16.msra.mxu0 %v505
      %560 = vmatprep.subr.bf16.mxu0 0
      %561 = vmatpush1.bf16.msra.mxu0 %v483
      %562 = vmatprep.subr.bf16.mxu0 0
      %563 = vmatpush1.bf16.msra.mxu0 %v480
      %564 = vmatprep.subr.bf16.mxu0 0
      %565 = vmatpush2.bf16.msra.mxu0 0
      %566 = vmatprep.subr.bf16.mxu0 0
      %567 = vmatpush2.bf16.msra.mxu0 0
      %568 = vmatprep.subr.bf16.mxu0 0
      %569 = vmatpush2.bf16.msra.mxu0 0
      %570 = vmatprep.subr.bf16.mxu0 0
      %571 = vmatpush2.bf16.msra.mxu0 0
      %572 = vmatprep.subr.bf16.mxu0 0
      %573 = vmatpush2.bf16.msra.mxu0 0
      %574 = vmatprep.subr.bf16.mxu0 0
      %575 = vmatpush2.bf16.msra.mxu0 0
      %576 = vmatprep.subr.bf16.mxu0 0
      %577 = vmatpush2.bf16.msra.mxu0 0
      %578 = vmatprep.subr.bf16.mxu0 0
      %579 = vmatpush2.bf16.msra.mxu0 0
      %580 = vmatprep.mubr.bf16.mxu0 0
      %581 = vmatmul.mubr.bf16.gmra.mxu0 %v495
      %v582 = vpop.f32.mrf.mxu0
      %v583 = vadd.f32 0.0, %v582
      %v584 = vpop.f32.mrf.mxu0
      %v585 = vpop.f32.mrf.mxu0
      %v586 = vpop.f32.mrf.mxu0
      %587 = vdwg.mxu0
      %v588 = vmul.f32 %v542, 0.23570226
      %v589 = vmul.f32 %v544, 0.23570226
      %v590 = vmul.f32 %v583, 0.23570226
      %v591 = vld [vmem:[%s2] sm:$0xff]
      %593 = vset.pattern.permute.xlu0 0
      %594 = vperm.xlu0 %593, %v591
      %v595 = vpop.permute.xlu0 %594
      %v597 = vadd.f32 %v588, %v595
      %v598 = vadd.f32 %v589, %v595
      %v599 = vadd.f32 %v590, %v595
      %600 = vst [vmem:[%s170] sm:$0xff] %v597
      %601 = vst [vmem:[%s170 + $0x8] sm:$0xff] %v598
      %602 = vst [vmem:[%s170 + $0x10] sm:$0xff] %v599
      %p603 = scmp.lt.s32.totalorder %s14, 1
      %s604 = scalar_select %p603, %s14, 1
      %s605 = smul.addr %s604, 3
      %s606 = smul.addr %s605, 8
      %s607 = scalar_lea.vmem %s3, %s606
      // Predicated region
      $region33: #{scaled_conv2d.1} parent=31 // pred_check
        %p608 = pneg %p100
      $region34: #{scaled_conv2d.1} parent=31 // pred_check_branch
        %610 = sbr.rel (%p608) target = $region36
      $region35: #{scaled_conv2d.1} parent=31 // pred_region
        _
      $region36: #{scaled_conv2d.1} parent=31 // pred_fallthru
        _
    $region32: #{scaled_conv2d.1} parent=5 // pred_fallthru
      _
    %p611 = scmp.le.s32.totalorder 2, %s9
    // Predicated region
    $region37: #{scaled_conv2d.1} parent=5 // pred_check
      %p612 = pneg %p611
    $region38: #{scaled_conv2d.1} parent=5 // pred_check_branch
      %614 = sbr.rel (%p612) target = $region40
    $region39: #{scaled_conv2d.1} parent=5 // pred_region
      %s615 = ssub.s32 %s9, 2
      // Predicated region
      $region41: #{scaled_conv2d.1} parent=39 // pred_check
        %p616 = pneg %p106
      $region42: #{scaled_conv2d.1} parent=39 // pred_check_branch
        %618 = sbr.rel (%p616) target = $region44
      $region43: #{scaled_conv2d.1} parent=39 // pred_region
        %p619 = scmp.lt.s32.totalorder %s15, 1
        %s620 = scalar_select %p619, %s15, 1
        %s621 = smul.addr %s620, 3
        %s622 = smul.addr %s621, 8
        %s623 = scalar_lea.vmem %s3, %s622
      $region44: #{scaled_conv2d.1} parent=39 // pred_fallthru
        _
    $region40: #{scaled_conv2d.1} parent=5 // pred_fallthru
      _
  $region6: #{scaled_conv2d.1} parent=0 // loop_footer
    %s13 = sadd.s32 1, %s9
  $region7: #{scaled_conv2d.1} parent=0 // loop_footer_branch
    %8 = sbr.rel target = $region3
  $region8: #{scaled_conv2d.1} parent=0 // loop_exit
    _

</llo_original>
